<compile_context>
chip_gen: v7x
topology: tpu7x:2x2x1
jax: 0.10.0
libtpu: 0.0.40
codegen_flags: <defaults>
</compile_context>

<pallas_src>
import functools
import math

import jax
import jax.numpy as jnp
from jax.experimental import pallas as pl
from jax.experimental.pallas import tpu as pltpu


def _norm_quant_kernel(x_ref, w_ref, q_ref, scale_ref, *, eps):
    # x_ref:     (TM, D)  input activations (any float dtype)
    # w_ref:     (1, D)   RMSNorm weight
    # q_ref:     (TM, D)  int8 quantized output
    # scale_ref: (TM, 1)  per-token dequant scale (float32)
    x = x_ref[...].astype(jnp.float32)
    w = w_ref[...].astype(jnp.float32)              # (1, D) broadcasts over rows

    # Row statistics.
    ms = jnp.mean(x * x, axis=-1, keepdims=True)    # (TM, 1)
    xw = x * w                                      # (TM, D); rsqrt cancels in q
    amax = jnp.max(jnp.abs(xw), axis=-1, keepdims=True)  # (TM, 1) = max|x*w|

    # scale = rsqrt(ms + eps) * amax / 127  ==  max|normed| / 127
    r = jax.lax.rsqrt(ms + eps)                     # (TM, 1)
    scale_ref[...] = (r * amax * jnp.float32(1.0 / 127.0)).astype(jnp.float32)

    # q = round(normed / scale) = round(127 * xw / amax); 127/amax via EUP recip.
    safe_amax = jnp.where(amax == 0.0, 1.0, amax)   # guard all-zero rows
    inv = 127.0 * pl.reciprocal(safe_amax, approx=True)   # (TM, 1)
    q = jnp.clip(jnp.round(xw * inv), -127.0, 127.0)
    q_ref[...] = q.astype(jnp.int8)


def _round_up(a, b):
    return (a + b - 1) // b * b


def _vmem_budget_bytes():
    """(tile-sizing budget, vmem_limit_bytes), derived from the chip's VMEM."""
    cap = None
    try:
        cap = int(pltpu.get_tpu_info().vmem_capacity_bytes)
    except Exception:
        cap = None
    if not cap or cap <= 0:
        cap = 64 * 1024 * 1024  # conservative fallback: v7x per-TensorCore VMEM
    # Scoped limit: ~80% of physical with a 16 MiB floor of headroom
    # (-> ~48 MiB on 64 MiB parts, ~102 MiB on 128 MiB parts).
    limit = min(int(cap * 0.8), cap - 16 * 1024 * 1024)
    limit = max(limit, 32 * 1024 * 1024)
    # Tile-sizing budget: leave slack under `limit` for intermediates Mosaic
    # materializes beyond our per-row estimate.
    budget = int(cap * 0.55)
    return budget, limit


def _choose_tile_rows(tokens, dim, in_itemsize, budget):
    """Pick the token-tile height (rows per grid step)."""
    if tokens <= 32:
        # One full-array block (block dim == array dim is always a legal layout).
        return max(tokens, 1)
    # Per-row VMEM: double-buffered input + double-buffered int8 output
    # + ~4 (TM, D) f32 intermediates + lane-padded (TM, 128) f32 scale buffers.
    per_row = dim * (2 * in_itemsize + 2 * 1 + 4 * 4) + 2 * 512
    tm = (budget // per_row) // 32 * 32
    tm = max(32, min(2048, tm))
    tm = min(tm, _round_up(tokens, 32))
    # Force >= 2 grid steps so the "parallel" token axis can shard across both
    # TensorCores on 2-TC chips (v7x); one extra step is noise on 1-TC chips.
    tm = min(tm, _round_up((tokens + 1) // 2, 32))
    return tm


def norm_and_quant(x, weight, eps=1e-6, tm=None):
    """x: (..., dim) float array; weight: (dim,).
    Returns (q int8 of x.shape, scale float32 of x.shape[:-1] + (1,))."""
    orig_shape = x.shape
    dim = orig_shape[-1]
    tokens = math.prod(orig_shape[:-1]) if len(orig_shape) > 1 else 1
    x2d = x.reshape(tokens, dim)
    w2d = weight.reshape(1, dim)

    budget, vmem_limit = _vmem_budget_bytes()
    if tm is None:
        tm = _choose_tile_rows(tokens, dim, jnp.dtype(x.dtype).itemsize, budget)

    grid = pl.cdiv(tokens, tm)
    kernel = functools.partial(_norm_quant_kernel, eps=eps)

    q, scale = pl.pallas_call(
        kernel,
        out_shape=(
            jax.ShapeDtypeStruct((tokens, dim), jnp.int8),
            jax.ShapeDtypeStruct((tokens, 1), jnp.float32),
        ),
        grid_spec=pltpu.PrefetchScalarGridSpec(
            num_scalar_prefetch=0,
            grid=(grid,),
            in_specs=[
                pl.BlockSpec((tm, dim), lambda i: (i, 0)),
                pl.BlockSpec((1, dim), lambda i: (0, 0)),
            ],
            out_specs=(
                pl.BlockSpec((tm, dim), lambda i: (i, 0)),
                pl.BlockSpec((tm, 1), lambda i: (i, 0)),
            ),
        ),
        compiler_params=pltpu.CompilerParams(
            dimension_semantics=("parallel",),
            vmem_limit_bytes=vmem_limit,
        ),
    )(x2d, w2d)

    q = q.reshape(orig_shape)
    scale = scale.reshape(orig_shape[:-1] + (1,))
    return q, scale


def _reference(x, weight, eps=1e-6):
    xf = x.astype(jnp.float32)
    normed = xf * jax.lax.rsqrt(jnp.mean(xf * xf, -1, keepdims=True) + eps)
    normed = normed * weight.astype(jnp.float32)
    amax = jnp.max(jnp.abs(normed), -1, keepdims=True)
    scale = amax / 127.0
    safe = jnp.where(scale == 0.0, 1.0, scale)
    q = jnp.clip(jnp.round(normed / safe), -127.0, 127.0).astype(jnp.int8)
    return q, scale


if __name__ == "__main__":
    key = jax.random.PRNGKey(0)
    batch, seq, dim = 2, 8, 128
    kx, kw = jax.random.split(key)
    x = jax.random.normal(kx, (batch, seq, dim), dtype=jnp.float32)
    # deterministic parameter init: ones (matches nn.Parameter(torch.ones(dim)))
    weight = jnp.ones((dim,), dtype=jnp.float32)

    q, scale = norm_and_quant(x, weight)
    q = jax.block_until_ready(q)
    scale = jax.block_until_ready(scale)

    q_ref, scale_ref = _reference(x, weight)
    assert q.shape == (batch, seq, dim) and q.dtype == jnp.int8
    assert scale.shape == (batch, seq, 1) and scale.dtype == jnp.float32
    assert jnp.max(jnp.abs(scale - scale_ref)) < 1e-6
    # allow off-by-one from rounding-order / approx-reciprocal differences
    assert jnp.max(jnp.abs(q.astype(jnp.int32) - q_ref.astype(jnp.int32))) <= 1

    print("KERNEL_OK")
</pallas_src>

<mosaic_0001>
module attributes {stable_mosaic.version = 11 : i64} {
  func.func @_norm_quant_kernel(%arg0: i32, %arg1: memref<16x128xf32, #tpu.memory_space<vmem>>, %arg2: memref<1x128xf32, #tpu.memory_space<vmem>>, %arg3: memref<16x128xi8, #tpu.memory_space<vmem>>, %arg4: memref<16x1xf32, #tpu.memory_space<vmem>>) attributes {dimension_semantics = [#tpu.dimension_semantics<parallel>], iteration_bounds = array<i64: 1>, scalar_prefetch = 0 : i64, scratch_operands = 0 : i64, tpu.core_type = #tpu.core_type<tc>, window_params = [{transform_indices = @transform_0, window_bounds = array<i64: 16, 128>}, {pipeline_mode = #tpu.pipeline_mode<synchronous>, transform_indices = @transform_1, window_bounds = array<i64: 1, 128>}, {transform_indices = @transform_2, window_bounds = array<i64: 16, 128>}, {transform_indices = @transform_3, window_bounds = array<i64: 16, 1>}]} {
    %c0 = arith.constant 0 : index
    %c0_0 = arith.constant 0 : index
    %0 = vector.load %arg1[%c0, %c0_0] : memref<16x128xf32, #tpu.memory_space<vmem>>, vector<16x128xf32>
    %c0_1 = arith.constant 0 : index
    %c0_2 = arith.constant 0 : index
    %1 = vector.load %arg2[%c0_1, %c0_2] : memref<1x128xf32, #tpu.memory_space<vmem>>, vector<1x128xf32>
    %2 = arith.mulf %0, %0 : vector<16x128xf32>
    %cst = arith.constant dense<0.000000e+00> : vector<16xf32>
    %3 = vector.multi_reduction <add>, %2, %cst [1] : vector<16x128xf32> to vector<16xf32>
    %4 = vector.shape_cast %3 : vector<16xf32> to vector<16x1xf32>
    %cst_3 = arith.constant 1.280000e+02 : f32
    %5 = vector.broadcast %cst_3 : f32 to vector<16x1xf32>
    %6 = arith.divf %4, %5 : vector<16x1xf32>
    %7 = vector.broadcast %1 : vector<1x128xf32> to vector<16x128xf32>
    %8 = arith.mulf %0, %7 : vector<16x128xf32>
    %9 = math.absf %8 : vector<16x128xf32>
    %cst_4 = arith.constant dense<0xFF800000> : vector<16xf32>
    %10 = vector.multi_reduction <maximumf>, %9, %cst_4 [1] : vector<16x128xf32> to vector<16xf32>
    %11 = vector.shape_cast %10 : vector<16xf32> to vector<16x1xf32>
    %cst_5 = arith.constant 9.99999997E-7 : f32
    %12 = vector.broadcast %cst_5 : f32 to vector<16x1xf32>
    %13 = arith.addf %6, %12 : vector<16x1xf32>
    %14 = math.rsqrt %13 : vector<16x1xf32>
    %15 = arith.mulf %14, %11 : vector<16x1xf32>
    %cst_6 = arith.constant 0.00787401571 : f32
    %16 = vector.broadcast %cst_6 : f32 to vector<16x1xf32>
    %17 = arith.mulf %15, %16 : vector<16x1xf32>
    %c0_7 = arith.constant 0 : index
    %c0_8 = arith.constant 0 : index
    %18 = vector.load %arg4[%c0_7, %c0_8] : memref<16x1xf32, #tpu.memory_space<vmem>>, vector<16x1xf32>
    tpu.vector_store %arg4[%c0_7, %c0_8], %17 {strides = array<i32>} : memref<16x1xf32, #tpu.memory_space<vmem>>, vector<16x1xf32>,
    %cst_9 = arith.constant 0.000000e+00 : f32
    %19 = vector.broadcast %cst_9 : f32 to vector<16x1xf32>
    %20 = arith.cmpf oeq, %11, %19 : vector<16x1xf32>
    %cst_10 = arith.constant 1.000000e+00 : f32
    %21 = vector.broadcast %cst_10 : f32 to vector<16x1xf32>
    %22 = arith.select %20, %21, %11 : vector<16x1xi1>, vector<16x1xf32>
    %23 = tpu.reciprocal %22 {approx = true} : vector<16x1xf32> -> vector<16x1xf32>
    %cst_11 = arith.constant 1.270000e+02 : f32
    %24 = vector.broadcast %cst_11 : f32 to vector<16x1xf32>
    %25 = arith.mulf %24, %23 : vector<16x1xf32>
    %26 = vector.broadcast %25 : vector<16x1xf32> to vector<16x128xf32>
    %27 = arith.mulf %8, %26 : vector<16x128xf32>
    %28 = math.roundeven %27 : vector<16x128xf32>
    %cst_12 = arith.constant -1.270000e+02 : f32
    %cst_13 = arith.constant 1.270000e+02 : f32
    %29 = vector.broadcast %cst_12 : f32 to vector<16x128xf32>
    %30 = arith.maximumf %29, %28 : vector<16x128xf32>
    %31 = vector.broadcast %cst_13 : f32 to vector<16x128xf32>
    %32 = arith.minimumf %31, %30 : vector<16x128xf32>
    %33 = arith.fptosi %32 : vector<16x128xf32> to vector<16x128xi8>
    %c0_14 = arith.constant 0 : index
    %c0_15 = arith.constant 0 : index
    %34 = vector.load %arg3[%c0_14, %c0_15] : memref<16x128xi8, #tpu.memory_space<vmem>>, vector<16x128xi8>
    tpu.vector_store %arg3[%c0_14, %c0_15], %33 {strides = array<i32>} : memref<16x128xi8, #tpu.memory_space<vmem>>, vector<16x128xi8>,
    return
  }
  func.func @transform_0(%arg0: i32) -> (i32, i32) {
    %c0_i32 = arith.constant 0 : i32
    %c0_i32_0 = arith.constant 0 : i32
    return %arg0, %c0_i32 : i32, i32
  }
  func.func @transform_1(%arg0: i32) -> (i32, i32) {
    %c0_i32 = arith.constant 0 : i32
    %c0_i32_0 = arith.constant 0 : i32
    %c0_i32_1 = arith.constant 0 : i32
    return %c0_i32, %c0_i32_0 : i32, i32
  }
  func.func @transform_2(%arg0: i32) -> (i32, i32) {
    %c0_i32 = arith.constant 0 : i32
    %c0_i32_0 = arith.constant 0 : i32
    return %arg0, %c0_i32 : i32, i32
  }
  func.func @transform_3(%arg0: i32) -> (i32, i32) {
    %c0_i32 = arith.constant 0 : i32
    %c0_i32_0 = arith.constant 0 : i32
    return %arg0, %c0_i32 : i32, i32
  }
}

</mosaic_0001>

<llo_original>
// kernel: tpu_custom_call.1
$region0: #{tpu_custom_call.1}
  #allocation0 [shape = 'u32[]', space=smem, size = 0x4, offset = 0x4, fixed_abs, tag = 'smem constant byte address 0x4 - core index']
  #allocation1 [shape = 'u32[144,128]{1,0:T(1,128)}', space=vmem, size = 0x12000, scoped, tag = 'internal scratch']
  %s0 = inlined_call_operand.hbm [shape: f32[16,128], index: 0, kind: input, shape index: {}]
  %s1 = inlined_call_operand.vmem [shape: f32[1,128], index: 1, kind: input, shape index: {}]
  %s2 = inlined_call_operand.hbm [shape: s8[16,128], index: 2, kind: output, shape index: {0}]
  %s3 = inlined_call_operand.vmem [shape: f32[16,1], index: 3, kind: output, shape index: {1}]
  %4 = xla_tuple %s2, %s3
  %s5 = sld [smem:[#allocation0]]
  $region30: #{tpu_custom_call.1} parent=0
    _
  %s7 = ssub.s32 1, %s5
  %s8 = scalar_select 0, %s7, %s5
  $region1: #{tpu_custom_call.1} parent=0
    #allocation2 [shape = 'u8[8192]{0}', space=vmem, size = 0x2000, scoped, tag = 'input window, operand 0, single buffered']
    #allocation3 [shape = 's32[1]{0}', space=sflag, size = 0x4, scoped, tag = 'scoped memory for tpu_custom_call.1']
    #allocation4 [shape = 's32[1]{0}', space=sflag, size = 0x4, scoped, tag = 'scoped memory for tpu_custom_call.1']
    #allocation5 [shape = 'u8[2048]{0}', space=vmem, size = 0x800, scoped, tag = 'output window, operand 0, single buffered']
    %9 = vsyncpa [#allocation3], 0
    %10 = vsyncpa [#allocation4], 0
    // Predicated region
    $region2: #{tpu_custom_call.1} parent=1 // pred_check
      _
    $region3: #{tpu_custom_call.1} parent=1 // pred_check_branch
      %12 = sbr.rel (0) target = $region5
    $region4: #{tpu_custom_call.1} parent=1 // pred_region
      %s14 = ssub.s32 256, 256
      %15 = vsyncadd [#allocation3], %s14
      %s16 = sshll.u32 [#allocation2], 4
      %s17 = int_to_ptr.vmem [resolvable:$true] %s16
      %22 = dma.hbm_to_vmem [thread:$0]  %s0, 256, %s17, [#allocation3], 128, 128, 8
    $region5: #{tpu_custom_call.1} parent=1 // pred_fallthru
      _
    // Predicated region
    $region6: #{tpu_custom_call.1} parent=1 // pred_check
      _
    $region7: #{tpu_custom_call.1} parent=1 // pred_check_branch
      %24 = sbr.rel (0) target = $region9
    $region8: #{tpu_custom_call.1} parent=1 // pred_region
      _
    $region9: #{tpu_custom_call.1} parent=1 // pred_fallthru
      _
    // Predicated region
    $region10: #{tpu_custom_call.1} parent=1 // pred_check
      _
    $region11: #{tpu_custom_call.1} parent=1 // pred_check_branch
      %26 = sbr.rel (0) target = $region13
    $region12: #{tpu_custom_call.1} parent=1 // pred_region
      %27 = dma.done [#allocation3], 256
    $region13: #{tpu_custom_call.1} parent=1 // pred_fallthru
      _
    %v28 = vld [vmem:[#allocation2] sm:$0xff]
    %v29 = vld [vmem:[#allocation2 + $0x8] sm:$0xff]
    %v30 = vld [vmem:[%s1] sm:$0x1]
    %v31 = vmul.f32 %v28, %v28
    %v32 = vmul.f32 %v29, %v29
    %33 = vadd.xlane.f32.xlu0 %v31
    %v34 = vpop.xlane.xlu0 %33
    %35 = vadd.xlane.f32.xlu0 %v32
    %v36 = vpop.xlane.xlu0 %35
    %v37 = vrcp.pop 128.0
    %v38 = vmul.f32 %v34, %v37
    %v39 = vmul.f32 %v36, %v37
    %v41 = vlaneseq
    %v42 = vshrl.u32 %v41, 7
    %v43 = vsub.s32 0, %v42
    %v44 = vrot.slane %v30, %v43
    %v46 = vmul.f32 %v28, %v44
    %v47 = vmul.f32 %v29, %v44
    %v48 = vand.u32 2147483647, %v46
    %v49 = vand.u32 2147483647, %v47
    %50 = vmax.xlane.f32.xlu0 %v48
    %v51 = vpop.xlane.xlu0 %50
    %52 = vmax.xlane.f32.xlu0 %v49
    %v53 = vpop.xlane.xlu0 %52
    %v54 = vadd.f32 %v38, 1e-06
    %v55 = vadd.f32 %v39, 1e-06
    %v56 = vrsqrt.pop %v54
    %v57 = vrsqrt.pop %v55
    %v58 = vmul.f32 %v56, %v51
    %v59 = vmul.f32 %v57, %v53
    %v60 = vmul.f32 %v58, 0.007874016
    %v61 = vmul.f32 %v59, 0.007874016
    %vm62 = vcmask 7168
    %63 = vst.msk [vmem:[%s3] sm:$0xff] %vm62, %v60
    %64 = vst.msk [vmem:[%s3 + $0x8] sm:$0xff] %vm62, %v61
    %vm65 = vcmp.eq.f32.partialorder %v51, 0.0
    %vm66 = vcmp.eq.f32.partialorder %v53, 0.0
    %v67 = vsel %vm65, 1.0, %v51
    %v68 = vsel %vm66, 1.0, %v53
    %v69 = vrcp.pop %v67
    %v70 = vrcp.pop %v68
    %v71 = vmul.f32 %v69, 127.0
    %v72 = vmul.f32 %v70, 127.0
    %v73 = vmul.f32 %v46, %v71
    %v74 = vmul.f32 %v47, %v72
    %v75 = vround.ne.pseudo %v73
    %v76 = vround.ne.pseudo %v74
    %v77 = vmax.f32 %v75, -127.0
    %v78 = vmax.f32 %v76, -127.0
    %v79 = vmin.f32 %v77, 127.0
    %v80 = vmin.f32 %v78, 127.0
    %v81 = vtrunc.f32 %v79
    %v82 = vtrunc.f32 %v80
    %v83 = vpack.c.f32.eXmY %v81, %v82, 312
    %v87 = vpack.c.b8 %v83, %v83
    %v89 = vunpack.c.0.s8 %v87
    %v90 = vunpack.c.1.s8 %v87
    %v91 = vpack.c.b16 %v89, %v89
    %v92 = vpack.c.b8 %v91, %v91
    %v93 = vpack.c.b16 %v90, %v90
    %v94 = vpack.c.b8 %v93, %v93
    %95 = vst [vmem:[#allocation5] sm:$0x3] %v92
    %96 = vst [vmem:[#allocation5 + $0x2] sm:$0x3] %v94
    // Predicated region
    $region14: #{tpu_custom_call.1} parent=1 // pred_check
      _
    $region15: #{tpu_custom_call.1} parent=1 // pred_check_branch
      %98 = sbr.rel (0) target = $region17
    $region16: #{tpu_custom_call.1} parent=1 // pred_region
      %s100 = ssub.s32 64, 64
      %101 = vsyncadd [#allocation4], %s100
      %s102 = sshll.u32 [#allocation5], 4
      %s103 = int_to_ptr.vmem [resolvable:$true] %s102
      %108 = dma.vmem_to_hbm [thread:$0]  %s103, 64, %s2, [#allocation4], 32, 32, 2
    $region17: #{tpu_custom_call.1} parent=1 // pred_fallthru
      _
    // Predicated region
    $region18: #{tpu_custom_call.1} parent=1 // pred_check
      _
    $region19: #{tpu_custom_call.1} parent=1 // pred_check_branch
      %110 = sbr.rel (0) target = $region21
    $region20: #{tpu_custom_call.1} parent=1 // pred_region
      _
    $region21: #{tpu_custom_call.1} parent=1 // pred_fallthru
      _
    // Predicated region
    $region22: #{tpu_custom_call.1} parent=1 // pred_check
      _
    $region23: #{tpu_custom_call.1} parent=1 // pred_check_branch
      %112 = sbr.rel (0) target = $region25
    $region24: #{tpu_custom_call.1} parent=1 // pred_region
      %113 = dma.done [#allocation4], 64
    $region25: #{tpu_custom_call.1} parent=1 // pred_fallthru
      _
    // Predicated region
    $region26: #{tpu_custom_call.1} parent=1 // pred_check
      _
    $region27: #{tpu_custom_call.1} parent=1 // pred_check_branch
      %115 = sbr.rel (0) target = $region29
    $region28: #{tpu_custom_call.1} parent=1 // pred_region
      _
    $region29: #{tpu_custom_call.1} parent=1 // pred_fallthru
      _
    %116 = vsyncpa [#allocation3], 1
    %117 = vsyncpa [#allocation4], 1

</llo_original>
